<compile_context>
chip_gen: v6e
topology: v6e:2x2x1
jax: 0.10.0
libtpu: 0.0.40
codegen_flags: <defaults>
</compile_context>

<pallas_src>
import jax
import jax.numpy as jnp
from jax.experimental import pallas as pl
from jax.experimental.pallas import tpu as pltpu

_KLEN = 5
_PAD = _KLEN // 2  # ReplicationPad2d(int(5 / 2)) == 2

# Separable binomial weights: outer([1,4,6,4,1],[1,4,6,4,1]) / 256 == (g/16) x (g/16)
_W1 = 1.0 / 16.0
_W4 = 4.0 / 16.0
_W6 = 6.0 / 16.0

# Full 5x5 kernel (only used by the pure-JAX reference check below).
_GAUSS = [
    [1.0, 4.0, 6.0, 4.0, 1.0],
    [4.0, 16.0, 24.0, 16.0, 4.0],
    [6.0, 24.0, 36.0, 24.0, 6.0],
    [4.0, 16.0, 24.0, 16.0, 4.0],
    [1.0, 4.0, 6.0, 4.0, 1.0],
]
_GAUSS = [[v / 256.0 for v in row] for row in _GAUSS]


def _blur_kernel(x_ref, o_ref):
    # x_ref / o_ref: (BC, H, W) -- BC independent channels, full spatial plane.
    x = x_ref[...].astype(jnp.float32)  # cast once per block
    _, H, W = x.shape

    # ---- vertical pass (H / sublane axis); replication padding done in-kernel ----
    top = x[:, 0:1, :]
    bot = x[:, H - 1:H, :]
    xp = jnp.concatenate([top, top, x, bot, bot], axis=1)        # (BC, H+4, W)
    v = (_W6 * xp[:, 2:2 + H, :]
         + _W4 * (xp[:, 1:1 + H, :] + xp[:, 3:3 + H, :])
         + _W1 * (xp[:, 0:0 + H, :] + xp[:, 4:4 + H, :]))

    # ---- horizontal pass (W / lane axis); replication padding done in-kernel ----
    left = v[:, :, 0:1]
    right = v[:, :, W - 1:W]
    vp = jnp.concatenate([left, left, v, right, right], axis=2)  # (BC, H, W+4)
    out = (_W6 * vp[:, :, 2:2 + W]
           + _W4 * (vp[:, :, 1:1 + W] + vp[:, :, 3:3 + W])
           + _W1 * (vp[:, :, 0:0 + W] + vp[:, :, 4:4 + W]))

    o_ref[...] = out.astype(o_ref.dtype)


def _choose_bc(nc, h, w):
    """Channels per block: divide nc, fit a ~8 MiB f32 working-set budget,
    and prefer an even grid length (keeps both v7x TensorCores busy)."""
    budget = 8 * 1024 * 1024
    # ~10 f32 copies of a (bc, h, w) block: in/out double buffers + pass temporaries.
    cap = max(1, budget // (40 * h * w))
    best = 1
    for d in range(1, nc + 1):
        if nc % d == 0 and d <= cap:
            best = d
    if (nc // best) % 2 == 1:
        even = [d for d in range(1, best + 1)
                if nc % d == 0 and d <= cap and (nc // d) % 2 == 0]
        if even:
            best = max(even)
    return best


def gaussian_blur(x):
    """x: (N, C, H, W). Returns (N, C, H, W); matches the PyTorch module's forward."""
    N, C, H, W = x.shape
    nc = N * C
    x2 = x.reshape(nc, H, W)           # collapse N,C (free reshape)
    bc = _choose_bc(nc, H, W)
    grid = (nc // bc,)

    out = pl.pallas_call(
        _blur_kernel,
        out_shape=jax.ShapeDtypeStruct((nc, H, W), x.dtype),
        grid_spec=pltpu.PrefetchScalarGridSpec(
            num_scalar_prefetch=0,
            grid=grid,
            in_specs=[pl.BlockSpec((bc, H, W), lambda b: (b, 0, 0))],
            out_specs=pl.BlockSpec((bc, H, W), lambda b: (b, 0, 0)),
        ),
        compiler_params=pltpu.CompilerParams(
            dimension_semantics=("parallel",),
            vmem_limit_bytes=32 * 1024 * 1024,
        ),
    )(x2)
    return out.reshape(N, C, H, W)


def _reference_blur(x):
    """Pure-JAX reference: ReplicationPad2d(2) + depthwise 5x5 conv (non-separable)."""
    N, C, H, W = x.shape
    xp = jnp.pad(x, ((0, 0), (0, 0), (_PAD, _PAD), (_PAD, _PAD)), mode="edge")
    out = jnp.zeros((N, C, H, W), dtype=jnp.float32)
    for i in range(_KLEN):
        for j in range(_KLEN):
            out = out + _GAUSS[i][j] * xp[:, :, i:i + H, j:j + W].astype(jnp.float32)
    return out.astype(x.dtype)


if __name__ == "__main__":
    key = jax.random.PRNGKey(0)
    # Module's weight is repeated 3x (depthwise, groups = C) -> channels must be 3.
    x = jax.random.normal(key, (2, 3, 16, 16), dtype=jnp.float32)

    y = jax.block_until_ready(gaussian_blur(x))
    y_ref = _reference_blur(x)

    assert y.shape == (2, 3, 16, 16)
    assert jnp.allclose(y, y_ref, atol=1e-5, rtol=1e-5), float(jnp.max(jnp.abs(y - y_ref)))

    print("KERNEL_OK")
</pallas_src>

<mosaic_0001>
module attributes {stable_mosaic.version = 11 : i64} {
  func.func @_blur_kernel(%arg0: i32, %arg1: memref<3x16x16xf32, #tpu.memory_space<vmem>>, %arg2: memref<3x16x16xf32, #tpu.memory_space<vmem>>) attributes {dimension_semantics = [#tpu.dimension_semantics<parallel>], iteration_bounds = array<i64: 2>, scalar_prefetch = 0 : i64, scratch_operands = 0 : i64, tpu.core_type = #tpu.core_type<tc>, window_params = [{transform_indices = @transform_0, window_bounds = array<i64: 3, 16, 16>}, {transform_indices = @transform_1, window_bounds = array<i64: 3, 16, 16>}]} {
    %c0 = arith.constant 0 : index
    %c0_0 = arith.constant 0 : index
    %c0_1 = arith.constant 0 : index
    %0 = vector.load %arg1[%c0, %c0_0, %c0_1] : memref<3x16x16xf32, #tpu.memory_space<vmem>>, vector<3x16x16xf32>
    %1 = vector.extract_strided_slice %0 {offsets = [0, 0, 0], sizes = [3, 1, 16], strides = [1, 1, 1]} : vector<3x16x16xf32> to vector<3x1x16xf32>
    %2 = vector.extract_strided_slice %0 {offsets = [0, 15, 0], sizes = [3, 1, 16], strides = [1, 1, 1]} : vector<3x16x16xf32> to vector<3x1x16xf32>
    %3 = tpu.concatenate %1, %1, %0, %2, %2 in 1 : vector<3x1x16xf32>, vector<3x1x16xf32>, vector<3x16x16xf32>, vector<3x1x16xf32>, vector<3x1x16xf32> -> vector<3x20x16xf32>
    %4 = vector.extract_strided_slice %3 {offsets = [0, 2, 0], sizes = [3, 16, 16], strides = [1, 1, 1]} : vector<3x20x16xf32> to vector<3x16x16xf32>
    %cst = arith.constant 3.750000e-01 : f32
    %5 = vector.broadcast %cst : f32 to vector<3x16x16xf32>
    %6 = arith.mulf %5, %4 : vector<3x16x16xf32>
    %7 = vector.extract_strided_slice %3 {offsets = [0, 1, 0], sizes = [3, 16, 16], strides = [1, 1, 1]} : vector<3x20x16xf32> to vector<3x16x16xf32>
    %8 = vector.extract_strided_slice %3 {offsets = [0, 3, 0], sizes = [3, 16, 16], strides = [1, 1, 1]} : vector<3x20x16xf32> to vector<3x16x16xf32>
    %9 = arith.addf %7, %8 : vector<3x16x16xf32>
    %cst_2 = arith.constant 2.500000e-01 : f32
    %10 = vector.broadcast %cst_2 : f32 to vector<3x16x16xf32>
    %11 = arith.mulf %10, %9 : vector<3x16x16xf32>
    %12 = arith.addf %6, %11 : vector<3x16x16xf32>
    %13 = vector.extract_strided_slice %3 {offsets = [0, 0, 0], sizes = [3, 16, 16], strides = [1, 1, 1]} : vector<3x20x16xf32> to vector<3x16x16xf32>
    %14 = vector.extract_strided_slice %3 {offsets = [0, 4, 0], sizes = [3, 16, 16], strides = [1, 1, 1]} : vector<3x20x16xf32> to vector<3x16x16xf32>
    %15 = arith.addf %13, %14 : vector<3x16x16xf32>
    %cst_3 = arith.constant 6.250000e-02 : f32
    %16 = vector.broadcast %cst_3 : f32 to vector<3x16x16xf32>
    %17 = arith.mulf %16, %15 : vector<3x16x16xf32>
    %18 = arith.addf %12, %17 : vector<3x16x16xf32>
    %19 = vector.extract_strided_slice %18 {offsets = [0, 0, 0], sizes = [3, 16, 1], strides = [1, 1, 1]} : vector<3x16x16xf32> to vector<3x16x1xf32>
    %20 = vector.extract_strided_slice %18 {offsets = [0, 0, 15], sizes = [3, 16, 1], strides = [1, 1, 1]} : vector<3x16x16xf32> to vector<3x16x1xf32>
    %21 = tpu.concatenate %19, %19, %18, %20, %20 in 2 : vector<3x16x1xf32>, vector<3x16x1xf32>, vector<3x16x16xf32>, vector<3x16x1xf32>, vector<3x16x1xf32> -> vector<3x16x20xf32>
    %22 = vector.extract_strided_slice %21 {offsets = [0, 0, 2], sizes = [3, 16, 16], strides = [1, 1, 1]} : vector<3x16x20xf32> to vector<3x16x16xf32>
    %cst_4 = arith.constant 3.750000e-01 : f32
    %23 = vector.broadcast %cst_4 : f32 to vector<3x16x16xf32>
    %24 = arith.mulf %23, %22 : vector<3x16x16xf32>
    %25 = vector.extract_strided_slice %21 {offsets = [0, 0, 1], sizes = [3, 16, 16], strides = [1, 1, 1]} : vector<3x16x20xf32> to vector<3x16x16xf32>
    %26 = vector.extract_strided_slice %21 {offsets = [0, 0, 3], sizes = [3, 16, 16], strides = [1, 1, 1]} : vector<3x16x20xf32> to vector<3x16x16xf32>
    %27 = arith.addf %25, %26 : vector<3x16x16xf32>
    %cst_5 = arith.constant 2.500000e-01 : f32
    %28 = vector.broadcast %cst_5 : f32 to vector<3x16x16xf32>
    %29 = arith.mulf %28, %27 : vector<3x16x16xf32>
    %30 = arith.addf %24, %29 : vector<3x16x16xf32>
    %31 = vector.extract_strided_slice %21 {offsets = [0, 0, 0], sizes = [3, 16, 16], strides = [1, 1, 1]} : vector<3x16x20xf32> to vector<3x16x16xf32>
    %32 = vector.extract_strided_slice %21 {offsets = [0, 0, 4], sizes = [3, 16, 16], strides = [1, 1, 1]} : vector<3x16x20xf32> to vector<3x16x16xf32>
    %33 = arith.addf %31, %32 : vector<3x16x16xf32>
    %cst_6 = arith.constant 6.250000e-02 : f32
    %34 = vector.broadcast %cst_6 : f32 to vector<3x16x16xf32>
    %35 = arith.mulf %34, %33 : vector<3x16x16xf32>
    %36 = arith.addf %30, %35 : vector<3x16x16xf32>
    %c0_7 = arith.constant 0 : index
    %c0_8 = arith.constant 0 : index
    %c0_9 = arith.constant 0 : index
    %37 = vector.load %arg2[%c0_7, %c0_8, %c0_9] : memref<3x16x16xf32, #tpu.memory_space<vmem>>, vector<3x16x16xf32>
    tpu.vector_store %arg2[%c0_7, %c0_8, %c0_9], %36 {strides = array<i32>} : memref<3x16x16xf32, #tpu.memory_space<vmem>>, vector<3x16x16xf32>,
    return
  }
  func.func @transform_0(%arg0: i32) -> (i32, i32, i32) {
    %c0_i32 = arith.constant 0 : i32
    %c0_i32_0 = arith.constant 0 : i32
    %c0_i32_1 = arith.constant 0 : i32
    return %arg0, %c0_i32, %c0_i32_0 : i32, i32, i32
  }
  func.func @transform_1(%arg0: i32) -> (i32, i32, i32) {
    %c0_i32 = arith.constant 0 : i32
    %c0_i32_0 = arith.constant 0 : i32
    %c0_i32_1 = arith.constant 0 : i32
    return %arg0, %c0_i32, %c0_i32_0 : i32, i32, i32
  }
}

</mosaic_0001>

<llo_original>
// kernel: tpu_custom_call.1
$region0: #{tpu_custom_call.1}
  #allocation0 [shape = 'u32[]', space=smem, size = 0x4, offset = 0x4, fixed_abs, tag = 'smem constant byte address 0x4 - core index']
  #allocation1 [shape = 'u32[144,128]{1,0:T(1,128)}', space=vmem, size = 0x12000, scoped, tag = 'internal scratch']
  %s0 = inlined_call_operand.hbm [shape: f32[6,16,16], index: 0, kind: input, shape index: {}]
  %s1 = inlined_call_operand.hbm [shape: f32[6,16,16], index: 1, kind: output, shape index: {}]
  %s2 = sld [smem:[#allocation0]]
  $region41: #{tpu_custom_call.1} parent=0
    _
  %s4 = ssub.s32 1, %s2
  %s5 = scalar_select 0, %s4, %s2
  $region1: #{tpu_custom_call.1} parent=0
    #allocation2 [shape = 'u8[49152]{0}', space=vmem, size = 0xc000, scoped, tag = 'input window, operand 0']
    #allocation3 [shape = 's32[2]{0}', space=sflag, size = 0x8, scoped, tag = 'scoped memory for tpu_custom_call.1']
    #allocation4 [shape = 's32[2]{0}', space=sflag, size = 0x8, scoped, tag = 'scoped memory for tpu_custom_call.1']
    #allocation5 [shape = 'u8[49152]{0}', space=vmem, size = 0xc000, scoped, tag = 'output window, operand 0']
    %6 = vsyncpa [#allocation3], 0
    %s7 = scalar_lea.sflag [#allocation3], 1
    %8 = vsyncpa %s7, 0
    %9 = vsyncpa [#allocation4], 0
    %s10 = scalar_lea.sflag [#allocation4], 1
    %11 = vsyncpa %s10, 0
    loop: start=0, step=1, limit=4
    $region2: #{tpu_custom_call.1} parent=1 // loop_pre_header
      _
    $region3: #{tpu_custom_call.1} parent=1 // loop_header
      %s13 = sphi 0, %s17
      %p14 = scmp.ge.s32.totalorder %s13, 4
      %s23 = sphi 0, %s25
      %s26 = sphi 0, %s23
      %s27 = sphi 0, %s26
      %s43 = sphi 0, %s27
      %s49 = sphi 0, %s51
      %s52 = sphi 0, %s49
      %s53 = sphi 0, %s52
      %s69 = sphi 0, %s53
    $region4: #{tpu_custom_call.1} parent=1 // loop_header_branch
      %16 = sbr.rel (%p14) target = $region8
    $region5: #{tpu_custom_call.1} parent=1 // loop_body
      %s18 = ssub.s32 %s13, 1
      %s19 = ssub.s32 %s13, 2
      %s20 = sadd.s32 %s13, 1
      %s21 = ssub.s32 %s13, %s20
      %p22 = scmp.eq.s32.totalorder %s21, 0
      %s24 = sadd.s32 %s23, 1
      %s25 = scalar_select %p22, %s23, %s24
      %p28 = pneg %p22
      %p29 = scmp.eq.s32.totalorder %s13, 1
      %p30 = por %p28, %p29
      %p31 = scmp.ne.s32.totalorder %s23, %s26
      %p32 = scmp.eq.s32.totalorder %s13, 0
      %p33 = por %p31, %p32
      %p34 = scmp.ne.s32.totalorder %s23, %s26
      %p35 = scmp.eq.s32.totalorder %s18, 1
      %p36 = por %p34, %p35
      %p37 = scmp.ne.s32.totalorder %s26, %s27
      %p38 = scmp.eq.s32.totalorder %s18, 0
      %p39 = por %p37, %p38
      %p40 = scmp.ne.s32.totalorder %s26, %s27
      %p41 = scmp.eq.s32.totalorder %s19, 1
      %p42 = por %p40, %p41
      %p44 = scmp.ne.s32.totalorder %s27, %s43
      %p45 = scmp.eq.s32.totalorder %s19, 0
      %p46 = por %p44, %p45
      %s47 = ssub.s32 %s13, %s20
      %p48 = scmp.eq.s32.totalorder %s47, 0
      %s50 = sadd.s32 %s49, 1
      %s51 = scalar_select %p48, %s49, %s50
      %p54 = pneg %p48
      %p55 = scmp.eq.s32.totalorder %s13, 1
      %p56 = por %p54, %p55
      %p57 = scmp.ne.s32.totalorder %s49, %s52
      %p58 = scmp.eq.s32.totalorder %s13, 0
      %p59 = por %p57, %p58
      %p60 = scmp.ne.s32.totalorder %s49, %s52
      %p61 = scmp.eq.s32.totalorder %s18, 1
      %p62 = por %p60, %p61
      %p63 = scmp.ne.s32.totalorder %s52, %s53
      %p64 = scmp.eq.s32.totalorder %s18, 0
      %p65 = por %p63, %p64
      %p66 = scmp.ne.s32.totalorder %s52, %s53
      %p67 = scmp.eq.s32.totalorder %s19, 1
      %p68 = por %p66, %p67
      %p70 = scmp.ne.s32.totalorder %s53, %s69
      %p71 = scmp.eq.s32.totalorder %s19, 0
      %p72 = por %p70, %p71
      %p73 = scmp.le.s32.totalorder 1, %s13
      %p74 = scmp.lt.s32.totalorder %s13, 3
      %p75 = pnand %p73, %p74
      %p76 = pneg %p75
      // Predicated region
      $region9: #{tpu_custom_call.1} parent=5 // pred_check
        _
      $region10: #{tpu_custom_call.1} parent=5 // pred_check_branch
        %78 = sbr.rel (%p75) target = $region12
      $region11: #{tpu_custom_call.1} parent=5 // pred_region
        %s79 = ssub.s32 %s13, 1
      $region12: #{tpu_custom_call.1} parent=5 // pred_fallthru
        _
      %p80 = scmp.lt.s32.totalorder %s13, 2
      // Predicated region
      $region13: #{tpu_custom_call.1} parent=5 // pred_check
        %p81 = pneg %p80
      $region14: #{tpu_custom_call.1} parent=5 // pred_check_branch
        %83 = sbr.rel (%p81) target = $region16
      $region15: #{tpu_custom_call.1} parent=5 // pred_region
        // Predicated region
        $region17: #{tpu_custom_call.1} parent=15 // pred_check
          %p84 = pneg %p33
        $region18: #{tpu_custom_call.1} parent=15 // pred_check_branch
          %86 = sbr.rel (%p84) target = $region20
        $region19: #{tpu_custom_call.1} parent=15 // pred_region
          %s87 = sand.u32 %s23, 1
          %s88 = scalar_lea.sflag [#allocation3], %s87
          %s89 = sand.u32 %s23, 1
          %s90 = smul.addr %s89, 48
          %s91 = scalar_lea.vmem [#allocation2], %s90
          %s92 = smul.u32 3, %s13
          %s94 = ssub.s32 768, 768
          %95 = vsyncadd %s88, %s94
          %s96 = smul.addr %s92, 2
          %s97 = smul.addr %s96, 128
          %s98 = scalar_lea.hbm %s0, %s97
          %s99 = sshll.u32 %s91, 4
          %s100 = int_to_ptr.vmem [resolvable:$true] %s99
          %105 = dma.hbm_to_vmem [thread:$0]  %s98, 768, %s100, %s88, 128, 128, 8
        $region20: #{tpu_custom_call.1} parent=15 // pred_fallthru
          _
      $region16: #{tpu_custom_call.1} parent=5 // pred_fallthru
        _
      %p106 = scmp.le.s32.totalorder 1, %s13
      %p107 = scmp.lt.s32.totalorder %s13, 3
      %p108 = pnand %p106, %p107
      %p109 = pneg %p108
      // Predicated region
      $region21: #{tpu_custom_call.1} parent=5 // pred_check
        _
      $region22: #{tpu_custom_call.1} parent=5 // pred_check_branch
        %111 = sbr.rel (%p108) target = $region24
      $region23: #{tpu_custom_call.1} parent=5 // pred_region
        %s112 = ssub.s32 %s13, 1
        %s113 = sand.u32 %s26, 1
        %s114 = scalar_lea.sflag [#allocation3], %s113
        %s115 = sand.u32 %s26, 1
        %s116 = smul.addr %s115, 48
        %s117 = scalar_lea.vmem [#allocation2], %s116
        // Predicated region
        $region25: #{tpu_custom_call.1} parent=23 // pred_check
          %p118 = pneg %p39
        $region26: #{tpu_custom_call.1} parent=23 // pred_check_branch
          %120 = sbr.rel (%p118) target = $region28
        $region27: #{tpu_custom_call.1} parent=23 // pred_region
          %121 = dma.done %s114, 768
        $region28: #{tpu_custom_call.1} parent=23 // pred_fallthru
          _
        %s122 = sand.u32 %s26, 1
        %s123 = scalar_lea.sflag [#allocation3], %s122
        %s124 = sand.u32 %s26, 1
        %s125 = smul.addr %s124, 48
        %s126 = scalar_lea.vmem [#allocation2], %s125
        %p127 = pneg %p39
        %p128 = pneg %p36
        %p129 = pneg %p65
        %p130 = pneg %p62
        %s131 = sand.u32 %s52, 1
        %s132 = scalar_lea.sflag [#allocation4], %s131
        %s133 = sand.u32 %s52, 1
        %s134 = smul.addr %s133, 48
        %s135 = scalar_lea.vmem [#allocation5], %s134
        %s136 = smul.u32 3, %s18
        %s137 = smul.u32 3, %s18
        %v138 = vld [vmem:[%s117] sm:$0xff]
        %v139 = vld [vmem:[%s117 + $0x8] sm:$0xff]
        %v140 = vld [vmem:[%s117 + $0x10] sm:$0xff]
        %v141 = vld [vmem:[%s117 + $0x18] sm:$0xff]
        %v142 = vld [vmem:[%s117 + $0x20] sm:$0xff]
        %v143 = vld [vmem:[%s117 + $0x28] sm:$0xff]
        %v147 = vrot.slane %v138, 7
        %v148 = vrot.slane %v140, 7
        %v149 = vrot.slane %v142, 7
        %vm156 = vcmask 1041408
        %v157 = vrot.slane %v138, 6
        %v158 = vrot.slane %v139, 6
        %v159 = vsel %vm156, %v157, %v158
        %v160 = vrot.slane %v140, 6
        %v161 = vrot.slane %v141, 6
        %v162 = vsel %vm156, %v160, %v161
        %v163 = vrot.slane %v142, 6
        %v164 = vrot.slane %v143, 6
        %v165 = vsel %vm156, %v163, %v164
        %v175 = vrot.slane %v139, 5
        %v176 = vrot.slane %v141, 5
        %v177 = vrot.slane %v143, 5
        %v181 = vrot.slane %v139, 4
        %v182 = vrot.slane %v141, 4
        %v183 = vrot.slane %v143, 4
        %vm187 = vcmask 1040384
        %v188 = vsel %vm187, %v138, %v147
        %v189 = vsel %vm187, %v140, %v148
        %v190 = vsel %vm187, %v142, %v149
        %v191 = vsel %vm156, %v188, %v157
        %v192 = vsel %vm156, %v189, %v160
        %v193 = vsel %vm156, %v190, %v163
        %v194 = vsel %vm156, %v158, %v175
        %v195 = vsel %vm156, %v161, %v176
        %v196 = vsel %vm156, %v164, %v177
        %vm197 = vcmask 1042432
        %v198 = vsel %vm197, %v194, %v181
        %v199 = vsel %vm197, %v195, %v182
        %v200 = vsel %vm197, %v196, %v183
        %v201 = vmul.f32 %v191, 0.375
        %v202 = vmul.f32 %v159, 0.375
        %v203 = vmul.f32 %v198, 0.375
        %v204 = vmul.f32 %v192, 0.375
        %v205 = vmul.f32 %v162, 0.375
        %v206 = vmul.f32 %v199, 0.375
        %v207 = vmul.f32 %v193, 0.375
        %v208 = vmul.f32 %v165, 0.375
        %v209 = vmul.f32 %v200, 0.375
        %vm216 = vcmask 1045504
        %v217 = vrot.slane %v191, 2
        %v218 = vrot.slane %v159, 2
        %v219 = vsel %vm216, %v217, %v218
        %v220 = vrot.slane %v198, 2
        %v221 = vsel %vm216, %v218, %v220
        %v222 = vrot.slane %v192, 2
        %v223 = vrot.slane %v162, 2
        %v224 = vsel %vm216, %v222, %v223
        %v225 = vrot.slane %v199, 2
        %v226 = vsel %vm216, %v223, %v225
        %v227 = vrot.slane %v193, 2
        %v228 = vrot.slane %v165, 2
        %v229 = vsel %vm216, %v227, %v228
        %v230 = vrot.slane %v200, 2
        %v231 = vsel %vm216, %v228, %v230
        %v241 = vadd.f32 %v191, %v219
        %v242 = vadd.f32 %v159, %v221
        %v243 = vadd.f32 %v198, %v220
        %v244 = vadd.f32 %v192, %v224
        %v245 = vadd.f32 %v162, %v226
        %v246 = vadd.f32 %v199, %v225
        %v247 = vadd.f32 %v193, %v229
        %v248 = vadd.f32 %v165, %v231
        %v249 = vadd.f32 %v200, %v230
        %v250 = vmul.f32 %v241, 0.25
        %v251 = vmul.f32 %v242, 0.25
        %v252 = vmul.f32 %v243, 0.25
        %v253 = vmul.f32 %v244, 0.25
        %v254 = vmul.f32 %v245, 0.25
        %v255 = vmul.f32 %v246, 0.25
        %v256 = vmul.f32 %v247, 0.25
        %v257 = vmul.f32 %v248, 0.25
        %v258 = vmul.f32 %v249, 0.25
        %v268 = vrot.slane %v250, 7
        %v269 = vrot.slane %v251, 7
        %v270 = vsel %vm187, %v268, %v269
        %v271 = vrot.slane %v252, 7
        %v272 = vsel %vm187, %v269, %v271
        %v273 = vrot.slane %v253, 7
        %v274 = vrot.slane %v254, 7
        %v275 = vsel %vm187, %v273, %v274
        %v276 = vrot.slane %v255, 7
        %v277 = vsel %vm187, %v274, %v276
        %v278 = vrot.slane %v256, 7
        %v279 = vrot.slane %v257, 7
        %v280 = vsel %vm187, %v278, %v279
        %v281 = vrot.slane %v258, 7
        %v282 = vsel %vm187, %v279, %v281
        %v292 = vadd.f32 %v201, %v268
        %v293 = vadd.f32 %v202, %v270
        %v294 = vadd.f32 %v203, %v272
        %v295 = vadd.f32 %v204, %v273
        %v296 = vadd.f32 %v205, %v275
        %v297 = vadd.f32 %v206, %v277
        %v298 = vadd.f32 %v207, %v278
        %v299 = vadd.f32 %v208, %v280
        %v300 = vadd.f32 %v209, %v282
        %vm301 = vcmask 1043456
        %v302 = vrot.slane %v191, 4
        %v303 = vrot.slane %v159, 4
        %v304 = vsel %vm301, %v302, %v303
        %v305 = vrot.slane %v198, 4
        %v306 = vsel %vm301, %v303, %v305
        %v307 = vrot.slane %v192, 4
        %v308 = vrot.slane %v162, 4
        %v309 = vsel %vm301, %v307, %v308
        %v310 = vrot.slane %v199, 4
        %v311 = vsel %vm301, %v308, %v310
        %v312 = vrot.slane %v193, 4
        %v313 = vrot.slane %v165, 4
        %v314 = vsel %vm301, %v312, %v313
        %v315 = vrot.slane %v200, 4
        %v316 = vsel %vm301, %v313, %v315
        %v323 = vadd.f32 %v191, %v304
        %v324 = vadd.f32 %v159, %v306
        %v325 = vadd.f32 %v192, %v309
        %v326 = vadd.f32 %v162, %v311
        %v327 = vadd.f32 %v193, %v314
        %v328 = vadd.f32 %v165, %v316
        %v329 = vmul.f32 %v323, 0.0625
        %v330 = vmul.f32 %v324, 0.0625
        %v331 = vmul.f32 %v325, 0.0625
        %v332 = vmul.f32 %v326, 0.0625
        %v333 = vmul.f32 %v327, 0.0625
        %v334 = vmul.f32 %v328, 0.0625
        %v341 = vrot.slane %v329, 6
        %v342 = vrot.slane %v330, 6
        %v343 = vsel %vm156, %v341, %v342
        %v344 = vrot.slane %v331, 6
        %v345 = vrot.slane %v332, 6
        %v346 = vsel %vm156, %v344, %v345
        %v347 = vrot.slane %v333, 6
        %v348 = vrot.slane %v334, 6
        %v349 = vsel %vm156, %v347, %v348
        %v359 = vadd.f32 %v292, %v341
        %v360 = vadd.f32 %v293, %v343
        %v361 = vadd.f32 %v294, %v342
        %v362 = vadd.f32 %v295, %v344
        %v363 = vadd.f32 %v296, %v346
        %v364 = vadd.f32 %v297, %v345
        %v365 = vadd.f32 %v298, %v347
        %v366 = vadd.f32 %v299, %v349
        %v367 = vadd.f32 %v300, %v348
        %377 = vrot.lane.b32.xlu0 %v359, 1
        %v378 = vpop.permute.xlu0 %377
        %379 = vrot.lane.b32.xlu0 %v360, 1
        %v380 = vpop.permute.xlu0 %379
        %381 = vrot.lane.b32.xlu0 %v361, 1
        %v382 = vpop.permute.xlu0 %381
        %383 = vrot.lane.b32.xlu0 %v362, 1
        %v384 = vpop.permute.xlu0 %383
        %385 = vrot.lane.b32.xlu0 %v363, 1
        %v386 = vpop.permute.xlu0 %385
        %387 = vrot.lane.b32.xlu0 %v364, 1
        %v388 = vpop.permute.xlu0 %387
        %389 = vrot.lane.b32.xlu0 %v365, 1
        %v390 = vpop.permute.xlu0 %389
        %391 = vrot.lane.b32.xlu0 %v366, 1
        %v392 = vpop.permute.xlu0 %391
        %393 = vrot.lane.b32.xlu0 %v367, 1
        %v394 = vpop.permute.xlu0 %393
        %404 = vrot.lane.b32.xlu0 %v359, 2
        %v405 = vpop.permute.xlu0 %404
        %406 = vrot.lane.b32.xlu0 %v360, 2
        %v407 = vpop.permute.xlu0 %406
        %408 = vrot.lane.b32.xlu0 %v361, 2
        %v409 = vpop.permute.xlu0 %408
        %410 = vrot.lane.b32.xlu0 %v362, 2
        %v411 = vpop.permute.xlu0 %410
        %412 = vrot.lane.b32.xlu0 %v363, 2
        %v413 = vpop.permute.xlu0 %412
        %414 = vrot.lane.b32.xlu0 %v364, 2
        %v415 = vpop.permute.xlu0 %414
        %416 = vrot.lane.b32.xlu0 %v365, 2
        %v417 = vpop.permute.xlu0 %416
        %418 = vrot.lane.b32.xlu0 %v366, 2
        %v419 = vpop.permute.xlu0 %418
        %420 = vrot.lane.b32.xlu0 %v367, 2
        %v421 = vpop.permute.xlu0 %420
        %431 = vrot.lane.b32.xlu0 %v359, 3
        %v432 = vpop.permute.xlu0 %431
        %433 = vrot.lane.b32.xlu0 %v360, 3
        %v434 = vpop.permute.xlu0 %433
        %435 = vrot.lane.b32.xlu0 %v361, 3
        %v436 = vpop.permute.xlu0 %435
        %437 = vrot.lane.b32.xlu0 %v362, 3
        %v438 = vpop.permute.xlu0 %437
        %439 = vrot.lane.b32.xlu0 %v363, 3
        %v440 = vpop.permute.xlu0 %439
        %441 = vrot.lane.b32.xlu0 %v364, 3
        %v442 = vpop.permute.xlu0 %441
        %443 = vrot.lane.b32.xlu0 %v365, 3
        %v444 = vpop.permute.xlu0 %443
        %445 = vrot.lane.b32.xlu0 %v366, 3
        %v446 = vpop.permute.xlu0 %445
        %447 = vrot.lane.b32.xlu0 %v367, 3
        %v448 = vpop.permute.xlu0 %447
        %458 = vrot.lane.b32.xlu0 %v359, 4
        %v459 = vpop.permute.xlu0 %458
        %460 = vrot.lane.b32.xlu0 %v360, 4
        %v461 = vpop.permute.xlu0 %460
        %462 = vrot.lane.b32.xlu0 %v361, 4
        %v463 = vpop.permute.xlu0 %462
        %464 = vrot.lane.b32.xlu0 %v362, 4
        %v465 = vpop.permute.xlu0 %464
        %466 = vrot.lane.b32.xlu0 %v363, 4
        %v467 = vpop.permute.xlu0 %466
        %468 = vrot.lane.b32.xlu0 %v364, 4
        %v469 = vpop.permute.xlu0 %468
        %470 = vrot.lane.b32.xlu0 %v365, 4
        %v471 = vpop.permute.xlu0 %470
        %472 = vrot.lane.b32.xlu0 %v366, 4
        %v473 = vpop.permute.xlu0 %472
        %474 = vrot.lane.b32.xlu0 %v367, 4
        %v475 = vpop.permute.xlu0 %474
        %vm485 = vcmask 7168
        %v486 = vsel %vm485, %v359, %v378
        %v487 = vsel %vm485, %v360, %v380
        %v488 = vsel %vm485, %v361, %v382
        %v489 = vsel %vm485, %v362, %v384
        %v490 = vsel %vm485, %v363, %v386
        %v491 = vsel %vm485, %v364, %v388
        %v492 = vsel %vm485, %v365, %v390
        %v493 = vsel %vm485, %v366, %v392
        %v494 = vsel %vm485, %v367, %v394
        %vm495 = vcmask 15360
        %v496 = vsel %vm495, %v486, %v405
        %v497 = vsel %vm495, %v487, %v407
        %v498 = vsel %vm495, %v488, %v409
        %v499 = vsel %vm495, %v489, %v411
        %v500 = vsel %vm495, %v490, %v413
        %v501 = vsel %vm495, %v491, %v415
        %v502 = vsel %vm495, %v492, %v417
        %v503 = vsel %vm495, %v493, %v419
        %v504 = vsel %vm495, %v494, %v421
        %vm505 = vcmask 146432
        %v506 = vsel %vm505, %v496, %v432
        %v507 = vsel %vm505, %v497, %v434
        %v508 = vsel %vm505, %v498, %v436
        %v509 = vsel %vm505, %v499, %v438
        %v510 = vsel %vm505, %v500, %v440
        %v511 = vsel %vm505, %v501, %v442
        %v512 = vsel %vm505, %v502, %v444
        %v513 = vsel %vm505, %v503, %v446
        %v514 = vsel %vm505, %v504, %v448
        %vm515 = vcmask 154624
        %v516 = vsel %vm515, %v506, %v459
        %v517 = vsel %vm515, %v507, %v461
        %v518 = vsel %vm515, %v508, %v463
        %v519 = vsel %vm515, %v509, %v465
        %v520 = vsel %vm515, %v510, %v467
        %v521 = vsel %vm515, %v511, %v469
        %v522 = vsel %vm515, %v512, %v471
        %v523 = vsel %vm515, %v513, %v473
        %v524 = vsel %vm515, %v514, %v475
        %v525 = vmul.f32 %v516, 0.375
        %v526 = vmul.f32 %v517, 0.375
        %v527 = vmul.f32 %v518, 0.375
        %v528 = vmul.f32 %v519, 0.375
        %v529 = vmul.f32 %v520, 0.375
        %v530 = vmul.f32 %v521, 0.375
        %v531 = vmul.f32 %v522, 0.375
        %v532 = vmul.f32 %v523, 0.375
        %v533 = vmul.f32 %v524, 0.375
        %543 = vrot.lane.b32.xlu0 %v516, 126
        %v544 = vpop.permute.xlu0 %543
        %545 = vrot.lane.b32.xlu0 %v517, 126
        %v546 = vpop.permute.xlu0 %545
        %547 = vrot.lane.b32.xlu0 %v518, 126
        %v548 = vpop.permute.xlu0 %547
        %549 = vrot.lane.b32.xlu0 %v519, 126
        %v550 = vpop.permute.xlu0 %549
        %551 = vrot.lane.b32.xlu0 %v520, 126
        %v552 = vpop.permute.xlu0 %551
        %553 = vrot.lane.b32.xlu0 %v521, 126
        %v554 = vpop.permute.xlu0 %553
        %555 = vrot.lane.b32.xlu0 %v522, 126
        %v556 = vpop.permute.xlu0 %555
        %557 = vrot.lane.b32.xlu0 %v523, 126
        %v558 = vpop.permute.xlu0 %557
        %559 = vrot.lane.b32.xlu0 %v524, 126
        %v560 = vpop.permute.xlu0 %559
        %v570 = vadd.f32 %v516, %v544
        %v571 = vadd.f32 %v517, %v546
        %v572 = vadd.f32 %v518, %v548
        %v573 = vadd.f32 %v519, %v550
        %v574 = vadd.f32 %v520, %v552
        %v575 = vadd.f32 %v521, %v554
        %v576 = vadd.f32 %v522, %v556
        %v577 = vadd.f32 %v523, %v558
        %v578 = vadd.f32 %v524, %v560
        %v579 = vmul.f32 %v570, 0.25
        %v580 = vmul.f32 %v571, 0.25
        %v581 = vmul.f32 %v572, 0.25
        %v582 = vmul.f32 %v573, 0.25
        %v583 = vmul.f32 %v574, 0.25
        %v584 = vmul.f32 %v575, 0.25
        %v585 = vmul.f32 %v576, 0.25
        %v586 = vmul.f32 %v577, 0.25
        %v587 = vmul.f32 %v578, 0.25
        %597 = vrot.lane.b32.xlu0 %v579, 1
        %v598 = vpop.permute.xlu0 %597
        %599 = vrot.lane.b32.xlu0 %v580, 1
        %v600 = vpop.permute.xlu0 %599
        %601 = vrot.lane.b32.xlu0 %v581, 1
        %v602 = vpop.permute.xlu0 %601
        %603 = vrot.lane.b32.xlu0 %v582, 1
        %v604 = vpop.permute.xlu0 %603
        %605 = vrot.lane.b32.xlu0 %v583, 1
        %v606 = vpop.permute.xlu0 %605
        %607 = vrot.lane.b32.xlu0 %v584, 1
        %v608 = vpop.permute.xlu0 %607
        %609 = vrot.lane.b32.xlu0 %v585, 1
        %v610 = vpop.permute.xlu0 %609
        %611 = vrot.lane.b32.xlu0 %v586, 1
        %v612 = vpop.permute.xlu0 %611
        %613 = vrot.lane.b32.xlu0 %v587, 1
        %v614 = vpop.permute.xlu0 %613
        %v624 = vadd.f32 %v525, %v598
        %v625 = vadd.f32 %v526, %v600
        %v626 = vadd.f32 %v527, %v602
        %v627 = vadd.f32 %v528, %v604
        %v628 = vadd.f32 %v529, %v606
        %v629 = vadd.f32 %v530, %v608
        %v630 = vadd.f32 %v531, %v610
        %v631 = vadd.f32 %v532, %v612
        %v632 = vadd.f32 %v533, %v614
        %633 = vrot.lane.b32.xlu0 %v516, 124
        %v634 = vpop.permute.xlu0 %633
        %635 = vrot.lane.b32.xlu0 %v517, 124
        %v636 = vpop.permute.xlu0 %635
        %637 = vrot.lane.b32.xlu0 %v518, 124
        %v638 = vpop.permute.xlu0 %637
        %639 = vrot.lane.b32.xlu0 %v519, 124
        %v640 = vpop.permute.xlu0 %639
        %641 = vrot.lane.b32.xlu0 %v520, 124
        %v642 = vpop.permute.xlu0 %641
        %643 = vrot.lane.b32.xlu0 %v521, 124
        %v644 = vpop.permute.xlu0 %643
        %645 = vrot.lane.b32.xlu0 %v522, 124
        %v646 = vpop.permute.xlu0 %645
        %647 = vrot.lane.b32.xlu0 %v523, 124
        %v648 = vpop.permute.xlu0 %647
        %649 = vrot.lane.b32.xlu0 %v524, 124
        %v650 = vpop.permute.xlu0 %649
        %v660 = vadd.f32 %v516, %v634
        %v661 = vadd.f32 %v517, %v636
        %v662 = vadd.f32 %v518, %v638
        %v663 = vadd.f32 %v519, %v640
        %v664 = vadd.f32 %v520, %v642
        %v665 = vadd.f32 %v521, %v644
        %v666 = vadd.f32 %v522, %v646
        %v667 = vadd.f32 %v523, %v648
        %v668 = vadd.f32 %v524, %v650
        %v669 = vmul.f32 %v660, 0.0625
        %v670 = vmul.f32 %v661, 0.0625
        %v671 = vmul.f32 %v662, 0.0625
        %v672 = vmul.f32 %v663, 0.0625
        %v673 = vmul.f32 %v664, 0.0625
        %v674 = vmul.f32 %v665, 0.0625
        %v675 = vmul.f32 %v666, 0.0625
        %v676 = vmul.f32 %v667, 0.0625
        %v677 = vmul.f32 %v668, 0.0625
        %687 = vrot.lane.b32.xlu0 %v669, 2
        %v688 = vpop.permute.xlu0 %687
        %689 = vrot.lane.b32.xlu0 %v670, 2
        %v690 = vpop.permute.xlu0 %689
        %691 = vrot.lane.b32.xlu0 %v671, 2
        %v692 = vpop.permute.xlu0 %691
        %693 = vrot.lane.b32.xlu0 %v672, 2
        %v694 = vpop.permute.xlu0 %693
        %695 = vrot.lane.b32.xlu0 %v673, 2
        %v696 = vpop.permute.xlu0 %695
        %697 = vrot.lane.b32.xlu0 %v674, 2
        %v698 = vpop.permute.xlu0 %697
        %699 = vrot.lane.b32.xlu0 %v675, 2
        %v700 = vpop.permute.xlu0 %699
        %701 = vrot.lane.b32.xlu0 %v676, 2
        %v702 = vpop.permute.xlu0 %701
        %703 = vrot.lane.b32.xlu0 %v677, 2
        %v704 = vpop.permute.xlu0 %703
        %v714 = vadd.f32 %v624, %v688
        %v715 = vadd.f32 %v625, %v690
        %v716 = vadd.f32 %v626, %v692
        %v717 = vadd.f32 %v627, %v694
        %v718 = vadd.f32 %v628, %v696
        %v719 = vadd.f32 %v629, %v698
        %v720 = vadd.f32 %v630, %v700
        %v721 = vadd.f32 %v631, %v702
        %v722 = vadd.f32 %v632, %v704
        %732 = vrot.lane.b32.xlu0 %v714, 126
        %v733 = vpop.permute.xlu0 %732
        %734 = vrot.lane.b32.xlu0 %v715, 126
        %v735 = vpop.permute.xlu0 %734
        %736 = vrot.lane.b32.xlu0 %v716, 126
        %v737 = vpop.permute.xlu0 %736
        %738 = vrot.lane.b32.xlu0 %v717, 126
        %v739 = vpop.permute.xlu0 %738
        %740 = vrot.lane.b32.xlu0 %v718, 126
        %v741 = vpop.permute.xlu0 %740
        %742 = vrot.lane.b32.xlu0 %v719, 126
        %v743 = vpop.permute.xlu0 %742
        %744 = vrot.lane.b32.xlu0 %v720, 126
        %v745 = vpop.permute.xlu0 %744
        %746 = vrot.lane.b32.xlu0 %v721, 126
        %v747 = vpop.permute.xlu0 %746
        %748 = vrot.lane.b32.xlu0 %v722, 126
        %v749 = vpop.permute.xlu0 %748
        %vm759 = vcmask 130050
        %760 = vst.msk [vmem:[%s135 - $0x2] sm:$0xfc] %vm759, %v733
        %vm761 = vcmask 130048
        %762 = vst.msk [vmem:[%s135 + $0x6] sm:$0xff] %vm761, %v735
        %vm763 = vcmask 123904
        %764 = vst.msk [vmem:[%s135 + $0xe] sm:$0x3] %vm763, %v737
        %765 = vst.msk [vmem:[%s135 + $0xe] sm:$0xfc] %vm759, %v739
        %766 = vst.msk [vmem:[%s135 + $0x16] sm:$0xff] %vm761, %v741
        %767 = vst.msk [vmem:[%s135 + $0x1e] sm:$0x3] %vm763, %v743
        %768 = vst.msk [vmem:[%s135 + $0x1e] sm:$0xfc] %vm759, %v745
        %769 = vst.msk [vmem:[%s135 + $0x26] sm:$0xff] %vm761, %v747
        %770 = vst.msk [vmem:[%s135 + $0x2e] sm:$0x3] %vm763, %v749
        %s771 = sand.u32 %s52, 1
        %s772 = scalar_lea.sflag [#allocation4], %s771
        %s773 = sand.u32 %s52, 1
        %s774 = smul.addr %s773, 48
        %s775 = scalar_lea.vmem [#allocation5], %s774
        // Predicated region
        $region29: #{tpu_custom_call.1} parent=23 // pred_check
          %p776 = pneg %p62
        $region30: #{tpu_custom_call.1} parent=23 // pred_check_branch
          %778 = sbr.rel (%p776) target = $region32
        $region31: #{tpu_custom_call.1} parent=23 // pred_region
          %s779 = smul.u32 3, %s18
          %s781 = ssub.s32 768, 768
          %782 = vsyncadd %s772, %s781
          %s783 = smul.addr %s779, 2
          %s784 = smul.addr %s783, 128
          %s785 = scalar_lea.hbm %s1, %s784
          %s786 = sshll.u32 %s775, 4
          %s787 = int_to_ptr.vmem [resolvable:$true] %s786
          %792 = dma.vmem_to_hbm [thread:$0]  %s787, 768, %s785, %s772, 128, 128, 8
        $region32: #{tpu_custom_call.1} parent=23 // pred_fallthru
          _
      $region24: #{tpu_custom_call.1} parent=5 // pred_fallthru
        _
      %p793 = scmp.le.s32.totalorder 2, %s13
      // Predicated region
      $region33: #{tpu_custom_call.1} parent=5 // pred_check
        %p794 = pneg %p793
      $region34: #{tpu_custom_call.1} parent=5 // pred_check_branch
        %796 = sbr.rel (%p794) target = $region36
      $region35: #{tpu_custom_call.1} parent=5 // pred_region
        %s797 = ssub.s32 %s13, 2
        // Predicated region
        $region37: #{tpu_custom_call.1} parent=35 // pred_check
          %p798 = pneg %p68
        $region38: #{tpu_custom_call.1} parent=35 // pred_check_branch
          %800 = sbr.rel (%p798) target = $region40
        $region39: #{tpu_custom_call.1} parent=35 // pred_region
          %s801 = sand.u32 %s53, 1
          %s802 = scalar_lea.sflag [#allocation4], %s801
          %s803 = sand.u32 %s53, 1
          %s804 = smul.addr %s803, 48
          %s805 = scalar_lea.vmem [#allocation5], %s804
          %806 = dma.done %s802, 768
        $region40: #{tpu_custom_call.1} parent=35 // pred_fallthru
          _
      $region36: #{tpu_custom_call.1} parent=5 // pred_fallthru
        _
    $region6: #{tpu_custom_call.1} parent=1 // loop_footer
      %s17 = sadd.s32 1, %s13
    $region7: #{tpu_custom_call.1} parent=1 // loop_footer_branch
      %12 = sbr.rel target = $region3
    $region8: #{tpu_custom_call.1} parent=1 // loop_exit
      _
    %807 = vsyncpa [#allocation3], 1
    %s808 = scalar_lea.sflag [#allocation3], 1
    %809 = vsyncpa %s808, 1
    %810 = vsyncpa [#allocation4], 1
    %s811 = scalar_lea.sflag [#allocation4], 1
    %812 = vsyncpa %s811, 1

</llo_original>
